<compile_context>
chip_gen: v5e
topology: v5e:2x2
jax: 0.10.0
libtpu: 0.0.40
codegen_flags: <defaults>
</compile_context>

<pallas_src>
import functools

import jax
import jax.numpy as jnp
from jax.experimental import pallas as pl
from jax.experimental.pallas import tpu as pltpu

BN_EPS = 1e-5
_LANE = 128
_VMEM_BUDGET_BYTES = 8 * 1024 * 1024   # conservative across v5e/v6e/v7x
_MAX_TILE_R = 4096


def _round_up(x, m):
    return (x + m - 1) // m * m


def _pick_row_tiling(R, CK, C8):
    """Balanced row tiles (lane dim), multiple of 128, from a VMEM budget."""
    # double-buffered patches block + output block dominate the working set
    bytes_per_row = 2 * (CK + C8) * 4
    budget_tile = max(_LANE,
                      (_VMEM_BUDGET_BYTES // bytes_per_row) // _LANE * _LANE)
    max_tile = min(_MAX_TILE_R, budget_tile)
    num_tiles = -(-R // max_tile)
    tile_r = _round_up(-(-R // num_tiles), _LANE)   # balanced, <128 rows waste
    return tile_r, num_tiles


def _conv_relu_bn_kernel(p_ref, w_ref, prm_ref, o_ref, acc_ref, ss_ref,
                         *, n_rows, n_pad):
    """Two-pass conv+ReLU+BN over row (lane) tiles, channel-major layout.

    p_ref:   (CK, TILE_R)  im2col patches tile (rows on the lane axis)
    w_ref:   (C8, CK)      conv weight, channel rows zero-padded to C8
    prm_ref: (C8, 3)       packed per-channel [bias, gamma, beta]
    o_ref:   (C8, TILE_R)  output tile (written in pass 1 only)
    acc_ref: (C8, 2) VMEM  [sum(y), sum(y*y)] accumulated across tiles
    ss_ref:  (C8, 2) VMEM  [scale, shift] produced at end of pass 0
    """
    pass_id = pl.program_id(0)
    r_id = pl.program_id(1)
    n_r = pl.num_programs(1)

    bias = prm_ref[:, 0:1]                                  # (C8, 1)

    # Conv (MXU) + bias + ReLU, recomputed in both passes.  Lane dim = rows.
    y = jnp.dot(w_ref[...], p_ref[...], preferred_element_type=jnp.float32)
    y = jnp.maximum(y + bias, 0.0)

    @pl.when(pass_id == 0)
    def _stats_pass():
        @pl.when(r_id == 0)
        def _init():
            acc_ref[...] = jnp.zeros_like(acc_ref)

        # One full-tile accumulator update per step (no sub-tile masked vst).
        part = jnp.concatenate(
            [jnp.sum(y, axis=1, keepdims=True),
             jnp.sum(y * y, axis=1, keepdims=True)], axis=1)  # (C8, 2)
        acc_ref[...] = acc_ref[...] + part

        @pl.when(r_id == n_r - 1)
        def _finalize():
            # Zero-padded columns hold relu(bias), not real samples; subtract
            # their analytic contribution instead of masking every tile.
            rb = jnp.maximum(bias, 0.0)
            s = acc_ref[:, 0:1] - float(n_pad) * rb
            sq = acc_ref[:, 1:2] - float(n_pad) * rb * rb
            inv_n = 1.0 / float(n_rows)
            mean = s * inv_n
            # Single-pass E[y^2]-mean^2; clamp tiny f32 cancellation negatives.
            var = jnp.maximum(sq * inv_n - mean * mean, 0.0)
            gamma = prm_ref[:, 1:2]
            beta = prm_ref[:, 2:3]
            scale = gamma * jax.lax.rsqrt(var + BN_EPS)       # EUP rsqrt
            ss_ref[...] = jnp.concatenate([scale, beta - mean * scale], axis=1)

    @pl.when(pass_id == 1)
    def _normalize_pass():
        # BatchNorm as a single fused multiply-add per element.
        o_ref[...] = (y * ss_ref[:, 0:1] + ss_ref[:, 1:2]).astype(o_ref.dtype)


def conv_relu_batchnorm(x, weight, bias, gamma, beta,
                        stride=1, padding=0, dilation=1):
    """x: (N, C_in, L) f32.  weight: (C_out, C_in, K).  Returns (N, C_out, L_out)."""
    N, C_in, L = x.shape
    C_out, _, K = weight.shape

    # --- glue: pad + im2col in plain JAX (see TODO at top of file) ---
    x_pad = jnp.pad(x, ((0, 0), (0, 0), (padding, padding)))
    L_pad = L + 2 * padding
    L_out = (L_pad - dilation * (K - 1) - 1) // stride + 1

    idx = (jnp.arange(L_out)[:, None] * stride
           + jnp.arange(K)[None, :] * dilation)               # (L_out, K)
    patches = x_pad[:, :, idx]                                 # (N, C_in, L_out, K)
    # channel-major: (C_in, K, N, L_out) -> (CK, R); ck = ci*K + k matches
    # weight.reshape(C_out, C_in*K), r = n*L_out + l
    patches_t = jnp.transpose(patches, (1, 3, 0, 2)).reshape(C_in * K, N * L_out)

    R = N * L_out
    CK = C_in * K

    f32 = jnp.float32
    C8 = _round_up(C_out, 8)                  # sublane-aligned channel rows
    tile_r, num_r = _pick_row_tiling(R, CK, C8)
    R_pad = tile_r * num_r

    # Only the row (lane) axis and the channel sublane axis are padded; the
    # contraction dim CK stays un-padded in HBM.
    patches_p = jnp.zeros((CK, R_pad), f32).at[:, :R].set(patches_t.astype(f32))
    w_p = jnp.zeros((C8, CK), f32).at[:C_out, :].set(
        weight.reshape(C_out, CK).astype(f32))
    prm = jnp.zeros((C8, 3), f32)
    prm = prm.at[:C_out, 0].set(bias).at[:C_out, 1].set(gamma)
    prm = prm.at[:C_out, 2].set(beta)

    kernel = functools.partial(_conv_relu_bn_kernel, n_rows=R, n_pad=R_pad - R)

    cost = pl.CostEstimate(
        flops=int(2 * 2 * C8 * CK * R_pad),                   # two matmul passes
        transcendentals=int(C8),                              # per-channel rsqrt
        bytes_accessed=int(4 * (2 * CK * R_pad                # patches read x2
                                + C8 * CK + 3 * C8            # weight + params
                                + C8 * R_pad)))               # output write

    out_p = pl.pallas_call(
        kernel,
        out_shape=jax.ShapeDtypeStruct((C8, R_pad), f32),
        grid=(2, num_r),                                      # (pass, row tile)
        in_specs=[
            pl.BlockSpec((CK, tile_r), lambda p, r: (0, r)),
            pl.BlockSpec((C8, CK), lambda p, r: (0, 0)),
            pl.BlockSpec((C8, 3), lambda p, r: (0, 0)),
        ],
        # Pass 0 parks the output window on block (0, 0) and never writes it;
        # the window index does not change at the pass-0 -> pass-1 boundary, so
        # no writeback occurs until pass 1 has fully (re)written block 0.  This
        # relies on Pallas only writing back an output block when its block
        # index changes (or the grid ends); pass 1 then sweeps the real tiles.
        out_specs=pl.BlockSpec((C8, tile_r), lambda p, r: (0, p * r)),
        scratch_shapes=[
            pltpu.VMEM((C8, 2), f32),   # [sum, sum-of-squares] accumulator
            pltpu.VMEM((C8, 2), f32),   # fused BN [scale, shift]
        ],
        compiler_params=pltpu.CompilerParams(
            dimension_semantics=("arbitrary", "arbitrary"),
            vmem_limit_bytes=32 * 1024 * 1024),
        cost_estimate=cost,
    )(patches_p, w_p, prm)

    # (C8, R_pad) -> (C_out, N, L_out) -> (N, C_out, L_out): major-dim shuffle,
    # no lane transpose.
    out = out_p[:C_out, :R].reshape(C_out, N, L_out)
    return jnp.transpose(out, (1, 0, 2))


def _reference(x, weight, bias, gamma, beta, stride, padding, dilation):
    """Pure-JAX reference for correctness check."""
    y = jax.lax.conv_general_dilated(
        x, weight, window_strides=(stride,), padding=[(padding, padding)],
        rhs_dilation=(dilation,),
        dimension_numbers=("NCH", "OIH", "NCH"))
    y = y + bias[None, :, None]
    y = jnp.maximum(y, 0.0)
    mean = jnp.mean(y, axis=(0, 2), keepdims=True)
    var = jnp.mean((y - mean) ** 2, axis=(0, 2), keepdims=True)
    y = (y - mean) / jnp.sqrt(var + BN_EPS)
    return gamma[None, :, None] * y + beta[None, :, None]


if __name__ == "__main__":
    # module config
    in_channels, out_channels, kernel_size = 4, 8, 3
    stride, padding, dilation = 1, 1, 1

    # deterministic parameter / input init
    key = jax.random.PRNGKey(0)
    kx, kw, kb = jax.random.split(key, 3)

    N, L = 2, 16
    x = jax.random.normal(kx, (N, in_channels, L), dtype=jnp.float32)

    fan_in = in_channels * kernel_size
    bound = 1.0 / (fan_in ** 0.5)
    weight = jax.random.uniform(kw, (out_channels, in_channels, kernel_size),
                                minval=-bound, maxval=bound, dtype=jnp.float32)
    bias = jax.random.uniform(kb, (out_channels,),
                              minval=-bound, maxval=bound, dtype=jnp.float32)
    gamma = jnp.ones((out_channels,), jnp.float32)   # BatchNorm1d default weight
    beta = jnp.zeros((out_channels,), jnp.float32)   # BatchNorm1d default bias

    out = conv_relu_batchnorm(x, weight, bias, gamma, beta,
                              stride=stride, padding=padding, dilation=dilation)
    out = jax.block_until_ready(out)

    ref = _reference(x, weight, bias, gamma, beta, stride, padding, dilation)
    assert out.shape == ref.shape, (out.shape, ref.shape)
    assert jnp.allclose(out, ref, atol=1e-4, rtol=1e-4), \
        float(jnp.max(jnp.abs(out - ref)))

    print("KERNEL_OK")
</pallas_src>

<mosaic_0001>
module attributes {stable_mosaic.version = 11 : i64} {
  func.func @_conv_relu_bn_kernel(%arg0: i32, %arg1: i32, %arg2: memref<12x128xf32, #tpu.memory_space<vmem>>, %arg3: memref<8x12xf32, #tpu.memory_space<vmem>>, %arg4: memref<8x3xf32, #tpu.memory_space<vmem>>, %arg5: memref<8x128xf32, #tpu.memory_space<vmem>>, %arg6: memref<8x2xf32, #tpu.memory_space<vmem>>, %arg7: memref<8x2xf32, #tpu.memory_space<vmem>>) attributes {dimension_semantics = [#tpu.dimension_semantics<arbitrary>, #tpu.dimension_semantics<arbitrary>], iteration_bounds = array<i64: 2, 1>, scalar_prefetch = 0 : i64, scratch_operands = 2 : i64, tpu.core_type = #tpu.core_type<tc>, window_params = [{transform_indices = @transform_0, window_bounds = array<i64: 12, 128>}, {pipeline_mode = #tpu.pipeline_mode<synchronous>, transform_indices = @transform_1, window_bounds = array<i64: 8, 12>}, {pipeline_mode = #tpu.pipeline_mode<synchronous>, transform_indices = @transform_2, window_bounds = array<i64: 8, 3>}, {transform_indices = @transform_3, window_bounds = array<i64: 8, 128>}]} {
    %c0 = arith.constant 0 : index
    %c0_0 = arith.constant 0 : index
    %0 = vector.load %arg4[%c0, %c0_0] : memref<8x3xf32, #tpu.memory_space<vmem>>, vector<8x1xf32>
    %c0_1 = arith.constant 0 : index
    %c0_2 = arith.constant 0 : index
    %1 = vector.load %arg3[%c0_1, %c0_2] : memref<8x12xf32, #tpu.memory_space<vmem>>, vector<8x12xf32>
    %c0_3 = arith.constant 0 : index
    %c0_4 = arith.constant 0 : index
    %2 = vector.load %arg2[%c0_3, %c0_4] : memref<12x128xf32, #tpu.memory_space<vmem>>, vector<12x128xf32>
    %cst = arith.constant dense<0.000000e+00> : vector<8x128xf32>
    %3 = tpu.matmul %1, %2, %cst {dimension_numbers = #tpu.dot_dimension_numbers<[1], [0], [0], [1], [0, 0, 1, 1], [], []>} : vector<8x12xf32>, vector<12x128xf32>, vector<8x128xf32> -> vector<8x128xf32>
    %4 = vector.broadcast %0 : vector<8x1xf32> to vector<8x128xf32>
    %5 = arith.addf %3, %4 : vector<8x128xf32>
    %cst_5 = arith.constant 0.000000e+00 : f32
    %6 = vector.broadcast %cst_5 : f32 to vector<8x128xf32>
    %7 = arith.maximumf %5, %6 : vector<8x128xf32>
    %c0_i32 = arith.constant 0 : i32
    %8 = arith.cmpi eq, %arg0, %c0_i32 : i32
    %9 = arith.extui %8 : i1 to i32
    %c0_i32_6 = arith.constant 0 : i32
    %10 = arith.cmpi ne, %9, %c0_i32_6 : i32
    scf.if %10 {
      %c0_i32_8 = arith.constant 0 : i32
      %14 = arith.cmpi eq, %arg1, %c0_i32_8 : i32
      %15 = arith.extui %14 : i1 to i32
      %c0_i32_9 = arith.constant 0 : i32
      %16 = arith.cmpi ne, %15, %c0_i32_9 : i32
      scf.if %16 {
        %cst_18 = arith.constant 0.000000e+00 : f32
        %29 = vector.broadcast %cst_18 : f32 to vector<8x2xf32>
        %c0_19 = arith.constant 0 : index
        %c0_20 = arith.constant 0 : index
        %30 = vector.load %arg6[%c0_19, %c0_20] : memref<8x2xf32, #tpu.memory_space<vmem>>, vector<8x2xf32>
        tpu.vector_store %arg6[%c0_19, %c0_20], %29 {strides = array<i32>} : memref<8x2xf32, #tpu.memory_space<vmem>>, vector<8x2xf32>,
      } else {
      }
      %cst_10 = arith.constant dense<0.000000e+00> : vector<8xf32>
      %17 = vector.multi_reduction <add>, %7, %cst_10 [1] : vector<8x128xf32> to vector<8xf32>
      %18 = vector.shape_cast %17 : vector<8xf32> to vector<8x1xf32>
      %19 = arith.mulf %7, %7 : vector<8x128xf32>
      %cst_11 = arith.constant dense<0.000000e+00> : vector<8xf32>
      %20 = vector.multi_reduction <add>, %19, %cst_11 [1] : vector<8x128xf32> to vector<8xf32>
      %21 = vector.shape_cast %20 : vector<8xf32> to vector<8x1xf32>
      %22 = tpu.concatenate %18, %21 in 1 : vector<8x1xf32>, vector<8x1xf32> -> vector<8x2xf32>
      %c0_12 = arith.constant 0 : index
      %c0_13 = arith.constant 0 : index
      %23 = vector.load %arg6[%c0_12, %c0_13] : memref<8x2xf32, #tpu.memory_space<vmem>>, vector<8x2xf32>
      %24 = arith.addf %23, %22 : vector<8x2xf32>
      %c0_14 = arith.constant 0 : index
      %c0_15 = arith.constant 0 : index
      %25 = vector.load %arg6[%c0_14, %c0_15] : memref<8x2xf32, #tpu.memory_space<vmem>>, vector<8x2xf32>
      tpu.vector_store %arg6[%c0_14, %c0_15], %24 {strides = array<i32>} : memref<8x2xf32, #tpu.memory_space<vmem>>, vector<8x2xf32>,
      %c0_i32_16 = arith.constant 0 : i32
      %26 = arith.cmpi eq, %arg1, %c0_i32_16 : i32
      %27 = arith.extui %26 : i1 to i32
      %c0_i32_17 = arith.constant 0 : i32
      %28 = arith.cmpi ne, %27, %c0_i32_17 : i32
      scf.if %28 {
        %cst_18 = arith.constant 0.000000e+00 : f32
        %29 = vector.broadcast %cst_18 : f32 to vector<8x1xf32>
        %30 = arith.maximumf %0, %29 : vector<8x1xf32>
        %c0_19 = arith.constant 0 : index
        %c0_20 = arith.constant 0 : index
        %31 = vector.load %arg6[%c0_19, %c0_20] : memref<8x2xf32, #tpu.memory_space<vmem>>, vector<8x1xf32>
        %cst_21 = arith.constant 9.600000e+01 : f32
        %32 = vector.broadcast %cst_21 : f32 to vector<8x1xf32>
        %33 = arith.mulf %32, %30 : vector<8x1xf32>
        %34 = arith.subf %31, %33 : vector<8x1xf32>
        %c0_22 = arith.constant 0 : index
        %c1 = arith.constant 1 : index
        %35 = vector.load %arg6[%c0_22, %c1] : memref<8x2xf32, #tpu.memory_space<vmem>>, vector<8x1xf32>
        %cst_23 = arith.constant 9.600000e+01 : f32
        %36 = vector.broadcast %cst_23 : f32 to vector<8x1xf32>
        %37 = arith.mulf %36, %30 : vector<8x1xf32>
        %38 = arith.mulf %37, %30 : vector<8x1xf32>
        %39 = arith.subf %35, %38 : vector<8x1xf32>
        %cst_24 = arith.constant 3.125000e-02 : f32
        %40 = vector.broadcast %cst_24 : f32 to vector<8x1xf32>
        %41 = arith.mulf %34, %40 : vector<8x1xf32>
        %cst_25 = arith.constant 3.125000e-02 : f32
        %42 = vector.broadcast %cst_25 : f32 to vector<8x1xf32>
        %43 = arith.mulf %39, %42 : vector<8x1xf32>
        %44 = arith.mulf %41, %41 : vector<8x1xf32>
        %45 = arith.subf %43, %44 : vector<8x1xf32>
        %cst_26 = arith.constant 0.000000e+00 : f32
        %46 = vector.broadcast %cst_26 : f32 to vector<8x1xf32>
        %47 = arith.maximumf %45, %46 : vector<8x1xf32>
        %c0_27 = arith.constant 0 : index
        %c1_28 = arith.constant 1 : index
        %48 = vector.load %arg4[%c0_27, %c1_28] : memref<8x3xf32, #tpu.memory_space<vmem>>, vector<8x1xf32>
        %c0_29 = arith.constant 0 : index
        %c2 = arith.constant 2 : index
        %49 = vector.load %arg4[%c0_29, %c2] : memref<8x3xf32, #tpu.memory_space<vmem>>, vector<8x1xf32>
        %cst_30 = arith.constant 9.99999974E-6 : f32
        %50 = vector.broadcast %cst_30 : f32 to vector<8x1xf32>
        %51 = arith.addf %47, %50 : vector<8x1xf32>
        %52 = math.rsqrt %51 : vector<8x1xf32>
        %53 = arith.mulf %48, %52 : vector<8x1xf32>
        %54 = arith.mulf %41, %53 : vector<8x1xf32>
        %55 = arith.subf %49, %54 : vector<8x1xf32>
        %56 = tpu.concatenate %53, %55 in 1 : vector<8x1xf32>, vector<8x1xf32> -> vector<8x2xf32>
        %c0_31 = arith.constant 0 : index
        %c0_32 = arith.constant 0 : index
        %57 = vector.load %arg7[%c0_31, %c0_32] : memref<8x2xf32, #tpu.memory_space<vmem>>, vector<8x2xf32>
        tpu.vector_store %arg7[%c0_31, %c0_32], %56 {strides = array<i32>} : memref<8x2xf32, #tpu.memory_space<vmem>>, vector<8x2xf32>,
      } else {
      }
    } else {
    }
    %c1_i32 = arith.constant 1 : i32
    %11 = arith.cmpi eq, %arg0, %c1_i32 : i32
    %12 = arith.extui %11 : i1 to i32
    %c0_i32_7 = arith.constant 0 : i32
    %13 = arith.cmpi ne, %12, %c0_i32_7 : i32
    scf.if %13 {
      %c0_8 = arith.constant 0 : index
      %c0_9 = arith.constant 0 : index
      %14 = vector.load %arg7[%c0_8, %c0_9] : memref<8x2xf32, #tpu.memory_space<vmem>>, vector<8x1xf32>
      %15 = vector.broadcast %14 : vector<8x1xf32> to vector<8x128xf32>
      %16 = arith.mulf %7, %15 : vector<8x128xf32>
      %c0_10 = arith.constant 0 : index
      %c1 = arith.constant 1 : index
      %17 = vector.load %arg7[%c0_10, %c1] : memref<8x2xf32, #tpu.memory_space<vmem>>, vector<8x1xf32>
      %18 = vector.broadcast %17 : vector<8x1xf32> to vector<8x128xf32>
      %19 = arith.addf %16, %18 : vector<8x128xf32>
      %c0_11 = arith.constant 0 : index
      %c0_12 = arith.constant 0 : index
      %20 = vector.load %arg5[%c0_11, %c0_12] : memref<8x128xf32, #tpu.memory_space<vmem>>, vector<8x128xf32>
      tpu.vector_store %arg5[%c0_11, %c0_12], %19 {strides = array<i32>} : memref<8x128xf32, #tpu.memory_space<vmem>>, vector<8x128xf32>,
    } else {
    }
    return
  }
  func.func @transform_0(%arg0: i32, %arg1: i32) -> (i32, i32) {
    %c0_i32 = arith.constant 0 : i32
    %c0_i32_0 = arith.constant 0 : i32
    return %c0_i32, %arg1 : i32, i32
  }
  func.func @transform_1(%arg0: i32, %arg1: i32) -> (i32, i32) {
    %c0_i32 = arith.constant 0 : i32
    %c0_i32_0 = arith.constant 0 : i32
    %c0_i32_1 = arith.constant 0 : i32
    return %c0_i32, %c0_i32_0 : i32, i32
  }
  func.func @transform_2(%arg0: i32, %arg1: i32) -> (i32, i32) {
    %c0_i32 = arith.constant 0 : i32
    %c0_i32_0 = arith.constant 0 : i32
    %c0_i32_1 = arith.constant 0 : i32
    return %c0_i32, %c0_i32_0 : i32, i32
  }
  func.func @transform_3(%arg0: i32, %arg1: i32) -> (i32, i32) {
    %0 = arith.muli %arg0, %arg1 : i32
    %c0_i32 = arith.constant 0 : i32
    %c0_i32_0 = arith.constant 0 : i32
    return %c0_i32, %0 : i32, i32
  }
}

</mosaic_0001>

<llo_original>
// kernel: tpu_custom_call.1
$region0: #{tpu_custom_call.1}
  #allocation0 [shape = 'u32[]', space=smem, size = 0x4, offset = 0x4, fixed_abs, tag = 'smem constant byte address 0x4 - core index']
  #allocation1 [shape = 'u32[72,128]{1,0:T(1,128)}', space=vmem, size = 0x9000, scoped, tag = 'internal scratch']
  #allocation2 [shape = 'f32[8,2]{1,0:T(8,128)}', space=vmem, size = 0x1000, scoped, tag = 'scratch operand']
  #allocation3 [shape = 'f32[8,2]{1,0:T(8,128)}', space=vmem, size = 0x1000, scoped, tag = 'scratch operand']
  %s0 = inlined_call_operand.hbm [shape: f32[12,128], index: 0, kind: input, shape index: {}]
  %s1 = inlined_call_operand.vmem [shape: f32[8,12], index: 1, kind: input, shape index: {}]
  %s2 = inlined_call_operand.vmem [shape: f32[8,3], index: 2, kind: input, shape index: {}]
  %s3 = inlined_call_operand.hbm [shape: f32[8,128], index: 3, kind: output, shape index: {}]
  %s4 = sld [smem:[#allocation0]]
  $region65: #{tpu_custom_call.1} parent=0
    _
  %s6 = ssub.s32 1, %s4
  %s7 = scalar_select 0, %s6, %s4
  $region1: #{tpu_custom_call.1} parent=0
    #allocation4 [shape = 'u8[8192]{0}', space=vmem, size = 0x2000, scoped, tag = 'input window, operand 0, single buffered']
    #allocation5 [shape = 's32[2]{0}', space=sflag, size = 0x8, scoped, tag = 'scoped memory for tpu_custom_call.1']
    #allocation6 [shape = 's32[2]{0}', space=sflag, size = 0x8, scoped, tag = 'scoped memory for tpu_custom_call.1']
    #allocation7 [shape = 'u8[8192]{0}', space=vmem, size = 0x2000, scoped, tag = 'output window, operand 0']
    %8 = vsyncpa [#allocation5], 0
    %9 = vsyncpa [#allocation6], 0
    %s10 = scalar_lea.sflag [#allocation6], 1
    %11 = vsyncpa %s10, 0
    loop: start=0, step=1, limit=4
    $region2: #{tpu_custom_call.1} parent=1 // loop_pre_header
      _
    $region3: #{tpu_custom_call.1} parent=1 // loop_header
      %s13 = sphi 0, %s17
      %p14 = scmp.ge.s32.totalorder %s13, 4
      %s20 = sphi 0, %s32
      %s21 = sphi 0, %s28
      %s22 = sphi 0, %s20
      %s23 = sphi 0, %s21
      %s24 = sphi 0, %s22
      %s25 = sphi 0, %s23
      %s35 = sphi 0, %s37
      %s38 = sphi 0, %s35
      %s39 = sphi 0, %s38
      %s55 = sphi 0, %s39
      %s59 = sphi 0, %s59
      %s61 = sphi 0, %s59
      %s62 = sphi 0, %s61
      %s76 = sphi 0, %s62
      %s80 = sphi 0, %s80
      %s82 = sphi 0, %s80
      %s83 = sphi 0, %s82
      %s97 = sphi 0, %s83
      %s105 = sphi 0, %s107
      %s108 = sphi 0, %s105
      %s109 = sphi 0, %s108
      %s125 = sphi 0, %s109
    $region4: #{tpu_custom_call.1} parent=1 // loop_header_branch
      %16 = sbr.rel (%p14) target = $region8
    $region5: #{tpu_custom_call.1} parent=1 // loop_body
      %s18 = ssub.s32 %s13, 1
      %s19 = ssub.s32 %s13, 2
      %s26 = sadd.s32 1, %s21
      %p27 = scmp.ge.s32.totalorder %s26, 1
      %s28 = scalar_select %p27, 0, %s26
      %s29 = sadd.s32 1, %s20
      %s30 = scalar_select %p27, %s29, %s20
      %p31 = scmp.ge.s32.totalorder %s30, 2
      %s32 = scalar_select %p31, 0, %s30
      %s33 = ssub.s32 %s21, %s28
      %p34 = scmp.eq.s32.totalorder %s33, 0
      %s36 = sadd.s32 %s35, 1
      %s37 = scalar_select %p34, %s35, %s36
      %p40 = pneg %p34
      %p41 = scmp.eq.s32.totalorder %s13, 1
      %p42 = por %p40, %p41
      %p43 = scmp.ne.s32.totalorder %s35, %s38
      %p44 = scmp.eq.s32.totalorder %s13, 0
      %p45 = por %p43, %p44
      %p46 = scmp.ne.s32.totalorder %s35, %s38
      %p47 = scmp.eq.s32.totalorder %s18, 1
      %p48 = por %p46, %p47
      %p49 = scmp.ne.s32.totalorder %s38, %s39
      %p50 = scmp.eq.s32.totalorder %s18, 0
      %p51 = por %p49, %p50
      %p52 = scmp.ne.s32.totalorder %s38, %s39
      %p53 = scmp.eq.s32.totalorder %s19, 1
      %p54 = por %p52, %p53
      %p56 = scmp.ne.s32.totalorder %s39, %s55
      %p57 = scmp.eq.s32.totalorder %s19, 0
      %p58 = por %p56, %p57
      %s60 = sadd.s32 %s59, 1
      %p63 = scmp.eq.s32.totalorder %s13, 1
      %p64 = scmp.ne.s32.totalorder %s59, %s61
      %p65 = scmp.eq.s32.totalorder %s13, 0
      %p66 = por %p64, %p65
      %p67 = scmp.ne.s32.totalorder %s59, %s61
      %p68 = scmp.eq.s32.totalorder %s18, 1
      %p69 = por %p67, %p68
      %p70 = scmp.ne.s32.totalorder %s61, %s62
      %p71 = scmp.eq.s32.totalorder %s18, 0
      %p72 = por %p70, %p71
      %p73 = scmp.ne.s32.totalorder %s61, %s62
      %p74 = scmp.eq.s32.totalorder %s19, 1
      %p75 = por %p73, %p74
      %p77 = scmp.ne.s32.totalorder %s62, %s76
      %p78 = scmp.eq.s32.totalorder %s19, 0
      %p79 = por %p77, %p78
      %s81 = sadd.s32 %s80, 1
      %p84 = scmp.eq.s32.totalorder %s13, 1
      %p85 = scmp.ne.s32.totalorder %s80, %s82
      %p86 = scmp.eq.s32.totalorder %s13, 0
      %p87 = por %p85, %p86
      %p88 = scmp.ne.s32.totalorder %s80, %s82
      %p89 = scmp.eq.s32.totalorder %s18, 1
      %p90 = por %p88, %p89
      %p91 = scmp.ne.s32.totalorder %s82, %s83
      %p92 = scmp.eq.s32.totalorder %s18, 0
      %p93 = por %p91, %p92
      %p94 = scmp.ne.s32.totalorder %s82, %s83
      %p95 = scmp.eq.s32.totalorder %s19, 1
      %p96 = por %p94, %p95
      %p98 = scmp.ne.s32.totalorder %s83, %s97
      %p99 = scmp.eq.s32.totalorder %s19, 0
      %p100 = por %p98, %p99
      %s101 = smul.u32 %s20, %s21
      %s102 = smul.u32 %s32, %s28
      %s103 = ssub.s32 %s101, %s102
      %p104 = scmp.eq.s32.totalorder %s103, 0
      %s106 = sadd.s32 %s105, 1
      %s107 = scalar_select %p104, %s105, %s106
      %p110 = pneg %p104
      %p111 = scmp.eq.s32.totalorder %s13, 1
      %p112 = por %p110, %p111
      %p113 = scmp.ne.s32.totalorder %s105, %s108
      %p114 = scmp.eq.s32.totalorder %s13, 0
      %p115 = por %p113, %p114
      %p116 = scmp.ne.s32.totalorder %s105, %s108
      %p117 = scmp.eq.s32.totalorder %s18, 1
      %p118 = por %p116, %p117
      %p119 = scmp.ne.s32.totalorder %s108, %s109
      %p120 = scmp.eq.s32.totalorder %s18, 0
      %p121 = por %p119, %p120
      %p122 = scmp.ne.s32.totalorder %s108, %s109
      %p123 = scmp.eq.s32.totalorder %s19, 1
      %p124 = por %p122, %p123
      %p126 = scmp.ne.s32.totalorder %s109, %s125
      %p127 = scmp.eq.s32.totalorder %s19, 0
      %p128 = por %p126, %p127
      %p129 = scmp.le.s32.totalorder 1, %s13
      %p130 = scmp.lt.s32.totalorder %s13, 3
      %p131 = pnand %p129, %p130
      %p132 = pneg %p131
      // Predicated region
      $region9: #{tpu_custom_call.1} parent=5 // pred_check
        _
      $region10: #{tpu_custom_call.1} parent=5 // pred_check_branch
        %134 = sbr.rel (%p131) target = $region12
      $region11: #{tpu_custom_call.1} parent=5 // pred_region
        %s135 = ssub.s32 %s13, 1
        // Predicated region
        $region13: #{tpu_custom_call.1} parent=11 // pred_check
          %p136 = pneg %p51
        $region14: #{tpu_custom_call.1} parent=11 // pred_check_branch
          %138 = sbr.rel (%p136) target = $region16
        $region15: #{tpu_custom_call.1} parent=11 // pred_region
          %140 = vsyncadd [#allocation5], 0
          %s141 = smul.addr %s23, 8
          %s142 = scalar_lea.hbm %s0, %s141
          %s143 = sshll.u32 %s142, 4
          %s144 = int_to_ptr.hbm [resolvable:$true] %s143
          %s145 = sshll.u32 [#allocation4], 4
          %s146 = int_to_ptr.vmem [resolvable:$true] %s145
          %151 = dma.hbm_to_vmem [thread:$0]  %s144, 256, %s146, [#allocation5], 128, 128, 8
        $region16: #{tpu_custom_call.1} parent=11 // pred_fallthru
          _
        // Predicated region
        $region17: #{tpu_custom_call.1} parent=11 // pred_check
          %p152 = pneg %p72
        $region18: #{tpu_custom_call.1} parent=11 // pred_check_branch
          %154 = sbr.rel (%p152) target = $region20
        $region19: #{tpu_custom_call.1} parent=11 // pred_region
          _
        $region20: #{tpu_custom_call.1} parent=11 // pred_fallthru
          _
        // Predicated region
        $region21: #{tpu_custom_call.1} parent=11 // pred_check
          %p155 = pneg %p93
        $region22: #{tpu_custom_call.1} parent=11 // pred_check_branch
          %157 = sbr.rel (%p155) target = $region24
        $region23: #{tpu_custom_call.1} parent=11 // pred_region
          _
        $region24: #{tpu_custom_call.1} parent=11 // pred_fallthru
          _
      $region12: #{tpu_custom_call.1} parent=5 // pred_fallthru
        _
      %p158 = scmp.lt.s32.totalorder %s13, 2
      // Predicated region
      $region25: #{tpu_custom_call.1} parent=5 // pred_check
        %p159 = pneg %p158
      $region26: #{tpu_custom_call.1} parent=5 // pred_check_branch
        %161 = sbr.rel (%p159) target = $region28
      $region27: #{tpu_custom_call.1} parent=5 // pred_region
        _
      $region28: #{tpu_custom_call.1} parent=5 // pred_fallthru
        _
      %p162 = scmp.le.s32.totalorder 1, %s13
      %p163 = scmp.lt.s32.totalorder %s13, 3
      %p164 = pnand %p162, %p163
      %p165 = pneg %p164
      // Predicated region
      $region29: #{tpu_custom_call.1} parent=5 // pred_check
        _
      $region30: #{tpu_custom_call.1} parent=5 // pred_check_branch
        %167 = sbr.rel (%p164) target = $region32
      $region31: #{tpu_custom_call.1} parent=5 // pred_region
        %s168 = ssub.s32 %s13, 1
        // Predicated region
        $region33: #{tpu_custom_call.1} parent=31 // pred_check
          %p169 = pneg %p51
        $region34: #{tpu_custom_call.1} parent=31 // pred_check_branch
          %171 = sbr.rel (%p169) target = $region36
        $region35: #{tpu_custom_call.1} parent=31 // pred_region
          %173 = dma.done [#allocation5], 256
        $region36: #{tpu_custom_call.1} parent=31 // pred_fallthru
          _
        %p174 = pneg %p51
        %p175 = pneg %p48
        %p176 = pneg %p72
        %p177 = pneg %p69
        %p178 = pneg %p93
        %p179 = pneg %p90
        %p180 = pneg %p121
        %p181 = pneg %p118
        %s182 = sand.u32 %s108, 1
        %s183 = scalar_lea.sflag [#allocation6], %s182
        %s184 = sand.u32 %s108, 1
        %s185 = smul.addr %s184, 8
        %s186 = scalar_lea.vmem [#allocation7], %s185
        %s187 = smul.u32 %s22, %s23
        %v188 = vld [vmem:[%s2] sm:$0xff]
        %v189 = vld [vmem:[%s1] sm:$0xff]
        %v190 = vld [vmem:[#allocation4] sm:$0xff]
        %v191 = vld [vmem:[#allocation4 + $0x8] sm:$0xf]
        %193 = vset.pattern.permute.xlu0 0
        %194 = vperm.xlu0 %193, %v188
        %v195 = vpop.permute.xlu0 %194
        %vm197 = vcmask 97280
        %v199 = vsel %vm197, %v189, 0
        %vm201 = vcmask 1043456
        %v203 = vsel %vm201, %v191, 0
        %205 = vmatpush.msra.mxu0 0.0
        %206 = vmatpush.msra.mxu0 0.0
        %207 = vmatpush.msra.mxu0 0.0
        %208 = vmatpush.msra.mxu0 0.0
        %209 = vmatpush.msra.mxu0 0.0
        %210 = vmatpush.msra.mxu0 0.0
        %211 = vmatpush.msra.mxu0 0.0
        %212 = vmatpush.msra.mxu0 0.0
        %213 = vmatpush.msra.mxu0 0.0
        %214 = vmatpush.msra.mxu0 0.0
        %215 = vmatpush.msra.mxu0 0.0
        %216 = vmatpush.msra.mxu0 0.0
        %217 = vmatpush.msra.mxu0 0.0
        %218 = vmatpush.msra.mxu0 0.0
        %219 = vmatpush.msra.mxu0 %v203
        %220 = vmatpush.msra.mxu0 %v190
        %221 = vmatmul.f32.gmra.mxu0 %v199
        %v222 = vpop.f32.mrf.mxu0
        %v223 = vadd.f32 %v195, %v222
        %224 = vdwg.mxu0
        %v225 = vmax.f32 %v223, 0.0
        %p226 = scmp.eq.s32.totalorder %s22, 0
        // Predicated region
        $region37: #{tpu_custom_call.1} parent=31 // pred_check
          %p227 = pneg %p226
        $region38: #{tpu_custom_call.1} parent=31 // pred_check_branch
          %229 = sbr.rel (%p227) target = $region40
        $region39: #{tpu_custom_call.1} parent=31 // pred_region
          %p230 = scmp.eq.s32.totalorder %s23, 0
          // Predicated region
          $region41: #{tpu_custom_call.1} parent=39 // pred_check
            %p231 = pneg %p230
          $region42: #{tpu_custom_call.1} parent=39 // pred_check_branch
            %233 = sbr.rel (%p231) target = $region44
          $region43: #{tpu_custom_call.1} parent=39 // pred_region
            %vm234 = vcmask 15360
            %235 = vst.msk [vmem:[#allocation2] sm:$0xff] %vm234, 0.0
          $region44: #{tpu_custom_call.1} parent=39 // pred_fallthru
            _
          %236 = vadd.xlane.f32.xlu0 %v225
          %v237 = vpop.xlane.xlu0 %236
          %v238 = vmul.f32 %v225, %v225
          %239 = vadd.xlane.f32.xlu0 %v238
          %v240 = vpop.xlane.xlu0 %239
          %vm241 = vcmask 7168
          %v242 = vsel %vm241, %v237, %v240
          %v243 = vld [vmem:[#allocation2] sm:$0xff]
          %v244 = vadd.f32 %v243, %v242
          %vm245 = vcmask 15360
          %246 = vst.msk [vmem:[#allocation2] sm:$0xff] %vm245, %v244
          // Predicated region
          $region45: #{tpu_custom_call.1} parent=39 // pred_check
            %p247 = pneg %p230
          $region46: #{tpu_custom_call.1} parent=39 // pred_check_branch
            %249 = sbr.rel (%p247) target = $region48
          $region47: #{tpu_custom_call.1} parent=39 // pred_region
            %v250 = vmax.f32 %v188, 0.0
            %v251 = vld [vmem:[#allocation2] sm:$0xff]
            %v252 = vmul.f32 %v250, 96.0
            %v253 = vsub.f32 %v251, %v252
            %v254 = vmul.f32 %v252, %v250
            %256 = vrot.lane.b32.xlu0 %v254, 1
            %v257 = vpop.permute.xlu0 %256
            %v259 = vsub.f32 %v251, %v257
            %v260 = vmul.f32 %v253, 0.03125
            %v261 = vmul.f32 %v259, 0.03125
            %v262 = vmul.f32 %v260, %v260
            %264 = vrot.lane.b32.xlu0 %v262, 1
            %v265 = vpop.permute.xlu0 %264
            %v267 = vsub.f32 %v261, %v265
            %v268 = vmax.f32 %v267, 0.0
            %v269 = vld [vmem:[%s2] sm:$0xff]
            %v270 = vadd.f32 %v268, 1e-05
            %v271 = vrsqrt.pop %v270
            %v272 = vmul.f32 %v271, %v270
            %v273 = vmul.f32 %v272, %v271
            %v274 = vmul.f32 0.5, %v273
            %v275 = vsub.f32 1.5, %v274
            %v276 = vmul.f32 %v271, %v275
            %vm277 = vweird.f32 %v270
            %vm278 = vweird.f32 %v271
            %vm279 = vmor %vm277, %vm278
            %v280 = vsel %vm279, %v271, %v276
            %v281 = vmul.f32 %v269, %v280
            %283 = vrot.lane.b32.xlu0 %v281, 127
            %v284 = vpop.permute.xlu0 %283
            %v286 = vmul.f32 %v260, %v284
            %288 = vrot.lane.b32.xlu0 %v286, 2
            %v289 = vpop.permute.xlu0 %288
            %v291 = vsub.f32 %v269, %v289
            %293 = vrot.lane.b32.xlu0 %v291, 127
            %v294 = vpop.permute.xlu0 %293
            %v296 = vsel %vm241, %v284, %v294
            %297 = vst.msk [vmem:[#allocation3] sm:$0xff] %vm245, %v296
          $region48: #{tpu_custom_call.1} parent=39 // pred_fallthru
            _
        $region40: #{tpu_custom_call.1} parent=31 // pred_fallthru
          _
        %p298 = scmp.eq.s32.totalorder %s22, 1
        // Predicated region
        $region49: #{tpu_custom_call.1} parent=31 // pred_check
          %p299 = pneg %p298
        $region50: #{tpu_custom_call.1} parent=31 // pred_check_branch
          %301 = sbr.rel (%p299) target = $region52
        $region51: #{tpu_custom_call.1} parent=31 // pred_region
          %v302 = vld [vmem:[#allocation3] sm:$0xff]
          %304 = vset.pattern.permute.xlu0 0
          %305 = vperm.xlu0 %304, %v302
          %v306 = vpop.permute.xlu0 %305
          %v308 = vmul.f32 %v225, %v306
          %309 = vset.pattern.permute.xlu0 1
          %310 = vperm.xlu0 %309, %v302
          %v311 = vpop.permute.xlu0 %310
          %v313 = vadd.f32 %v308, %v311
          %314 = vst [vmem:[%s186] sm:$0xff] %v313
        $region52: #{tpu_custom_call.1} parent=31 // pred_fallthru
          _
        %s315 = sand.u32 %s108, 1
        %s316 = scalar_lea.sflag [#allocation6], %s315
        %s317 = sand.u32 %s108, 1
        %s318 = smul.addr %s317, 8
        %s319 = scalar_lea.vmem [#allocation7], %s318
        // Predicated region
        $region53: #{tpu_custom_call.1} parent=31 // pred_check
          %p320 = pneg %p118
        $region54: #{tpu_custom_call.1} parent=31 // pred_check_branch
          %322 = sbr.rel (%p320) target = $region56
        $region55: #{tpu_custom_call.1} parent=31 // pred_region
          %s323 = smul.u32 %s22, %s23
          %325 = vsyncadd %s316, 0
          %s326 = smul.addr %s323, 8
          %s327 = scalar_lea.hbm %s3, %s326
          %s329 = sshll.u32 %s319, 4
          %s330 = int_to_ptr.vmem [resolvable:$true] %s329
          %s331 = sshll.u32 %s327, 4
          %s332 = int_to_ptr.hbm [resolvable:$true] %s331
          %334 = dma.vmem_to_hbm [thread:$0]  %s330, 128, %s332, %s316
        $region56: #{tpu_custom_call.1} parent=31 // pred_fallthru
          _
      $region32: #{tpu_custom_call.1} parent=5 // pred_fallthru
        _
      %p335 = scmp.le.s32.totalorder 2, %s13
      // Predicated region
      $region57: #{tpu_custom_call.1} parent=5 // pred_check
        %p336 = pneg %p335
      $region58: #{tpu_custom_call.1} parent=5 // pred_check_branch
        %338 = sbr.rel (%p336) target = $region60
      $region59: #{tpu_custom_call.1} parent=5 // pred_region
        %s339 = ssub.s32 %s13, 2
        // Predicated region
        $region61: #{tpu_custom_call.1} parent=59 // pred_check
          %p340 = pneg %p124
        $region62: #{tpu_custom_call.1} parent=59 // pred_check_branch
          %342 = sbr.rel (%p340) target = $region64
        $region63: #{tpu_custom_call.1} parent=59 // pred_region
          %s343 = sand.u32 %s109, 1
          %s344 = scalar_lea.sflag [#allocation6], %s343
          %s345 = sand.u32 %s109, 1
          %s346 = smul.addr %s345, 8
          %s347 = scalar_lea.vmem [#allocation7], %s346
          %349 = dma.done %s344, 128
        $region64: #{tpu_custom_call.1} parent=59 // pred_fallthru
          _
      $region60: #{tpu_custom_call.1} parent=5 // pred_fallthru
        _
    $region6: #{tpu_custom_call.1} parent=1 // loop_footer
      %s17 = sadd.s32 1, %s13
    $region7: #{tpu_custom_call.1} parent=1 // loop_footer_branch
      %12 = sbr.rel target = $region3
    $region8: #{tpu_custom_call.1} parent=1 // loop_exit
      _
    %350 = vsyncpa [#allocation5], 1
    %s351 = scalar_lea.sflag [#allocation5], 1
    %352 = vsyncpa %s351, 1
    %353 = vsyncpa [#allocation6], 1
    %s354 = scalar_lea.sflag [#allocation6], 1
    %355 = vsyncpa %s354, 1

</llo_original>
